<compile_context>
chip_gen: v6e
topology: v6e:2x2x1
jax: 0.10.0
libtpu: 0.0.40
codegen_flags: <defaults>
</compile_context>

<pallas_src>
import functools

import numpy as np
import jax
import jax.numpy as jnp
from jax import lax
from jax.experimental import pallas as pl
from jax.experimental.pallas import tpu as pltpu


def _round_up(x: int, m: int) -> int:
    return ((x + m - 1) // m) * m


def _make_cluster_loss_kernel(pmargin: float, margin: float):
    def kernel(bi_ref, bj_ref, wt_ref, x_i_ref, x_j_ref, lab_i_ref, lab_j_ref,
               pos_ref, neg_ref):
        # bi/bj/wt_ref : [ncores, P] int32 in SMEM (scalar-prefetched schedule)
        # x_i_ref      : [t, Dp]  bf16/f32   rows bi-block of X
        # x_j_ref      : [t, Dp]  bf16/f32   rows bj-block of X
        # lab_i_ref    : [t, 1]   int32
        # lab_j_ref    : [1, t]   int32
        # pos/neg_ref  : [1, t]   f32 lane-wise partial sums, resident across p
        c = pl.program_id(0)
        p = pl.program_id(1)
        wt = wt_ref[c, p]   # 1 = diagonal (row start), 2 = off-diagonal, 0 = pad

        @pl.when(wt == 1)   # first (diagonal) pair of this row block on this core
        def _():
            pos_ref[...] = jnp.zeros_like(pos_ref)
            neg_ref[...] = jnp.zeros_like(neg_ref)

        # NT matmul on the MXU: d[a, b] = <X_i[a, :], X_j[b, :]>, f32 accumulate.
        d = lax.dot_general(
            x_i_ref[...], x_j_ref[...],
            dimension_numbers=(((1,), (1,)), ((), ())),
            preferred_element_type=jnp.float32,
        )  # [t, t] f32

        # Label-equality matrix via pure VPU broadcast-compare (no pad masks:
        # pads have zero rows + sentinel labels; corrected on the host).
        same = lab_i_ref[...] == lab_j_ref[...]  # [t,1] == [1,t] -> [t,t]

        pos_c = jnp.where(same, jnp.maximum(pmargin - d, 0.0), 0.0)
        neg_c = jnp.where(same, 0.0, jnp.maximum(margin + d, 0.0))

        # Sublane reduce only; final cross-lane reduce deferred to the host.
        w = wt.astype(jnp.float32)
        pos_ref[...] += w * jnp.sum(pos_c, axis=0, keepdims=True)  # [1, t]
        neg_ref[...] += w * jnp.sum(neg_c, axis=0, keepdims=True)  # [1, t]

    return kernel


def _build_pair_schedule(g: int):
    """Upper-triangular block pairs (bi <= bj), LPT-balanced over 2 cores.

    Each core's list is ordered row-by-row with the diagonal pair first
    (weight 1 marks a row start / accumulator init).  Pads repeat the core's
    last real pair with weight 0 (no init, no contribution)."""
    ncores = 1 if g < 2 else 2
    core_rows = [[] for _ in range(ncores)]
    core_load = [0] * ncores
    for r in sorted(range(g), key=lambda r: -(g - r)):      # LPT by row size
        c = int(np.argmin(core_load))
        core_rows[c].append(r)
        core_load[c] += g - r
    P = max(core_load)
    bi = np.zeros((ncores, P), np.int32)
    bj = np.zeros((ncores, P), np.int32)
    wt = np.zeros((ncores, P), np.int32)
    for c in range(ncores):
        k = 0
        for r in sorted(core_rows[c]):
            for j in range(r, g):
                bi[c, k] = r
                bj[c, k] = j
                wt[c, k] = 1 if j == r else 2
                k += 1
        while k < P:                       # zero-weight padding
            bi[c, k] = bi[c, k - 1]
            bj[c, k] = bj[c, k - 1]
            wt[c, k] = 0
            k += 1
    return ncores, P, bi, bj, wt


@functools.partial(
    jax.jit,
    static_argnames=("pmargin", "margin", "alpha_pos", "alpha_neg", "tile",
                     "compute_dtype"))
def cluster_loss(X, labels, *, pmargin=1.0, margin=1.0,
                 alpha_pos=4.0, alpha_neg=1.0, tile=512,
                 compute_dtype=jnp.bfloat16):
    """Pallas implementation of ClusterLoss.forward with losstype='allall'.

    X:      [N, D] float array
    labels: [N]    integer array
    Returns a dict {'ctrd_pos': scalar, 'ctrd_neg': scalar} (float32).
    """
    N, D = X.shape

    # MXU-aligned square tile (symmetry pairing requires square blocks).
    t = max(128, (min(int(tile), _round_up(N, 128)) // 128) * 128)
    Np = _round_up(N, t)
    Dp = _round_up(D, 128)
    g = Np // t
    n_pad = Np - N

    ncores, P, bi_np, bj_np, wt_np = _build_pair_schedule(g)
    bi = jnp.asarray(bi_np)
    bj = jnp.asarray(bj_np)
    wt = jnp.asarray(wt_np)

    # Zero-pad X (zero rows -> dot products exactly 0); cast to compute dtype.
    Xp = jnp.zeros((Np, Dp), compute_dtype).at[:N, :D].set(X.astype(compute_dtype))
    labels_i = labels.astype(jnp.int32)
    # All pads share one sentinel label (differs from every real label), so
    # their contribution to pos/neg sums is a known constant, subtracted below.
    sentinel = jnp.min(labels_i) - 1
    labp = jnp.full((Np,), sentinel, jnp.int32).at[:N].set(labels_i)
    lab_col = labp.reshape(Np, 1)
    lab_row = labp.reshape(1, Np)

    kernel = _make_cluster_loss_kernel(float(pmargin), float(margin))

    dsize = jnp.dtype(compute_dtype).itemsize
    real_pairs = g * (g + 1) // 2
    cost = pl.CostEstimate(
        flops=2 * t * t * Dp * real_pairs,
        transcendentals=0,
        bytes_accessed=(g * t * Dp * dsize)            # X_i tiles (one per row)
                       + (real_pairs * t * Dp * dsize) # streamed X_j tiles
                       + 2 * g * t * 4,                # partial-sum outputs
    )

    # VMEM limit from the actual double-buffered footprint (+30% + 2 MiB slack).
    vmem_bytes = (2 * 2 * t * Dp * dsize   # X_i, X_j, double-buffered
                  + 2 * 2 * t * 4          # label tiles, int32
                  + 2 * 2 * t * 4)         # pos/neg output blocks, f32
    vmem_limit = min(int(vmem_bytes * 1.3) + (2 << 20), 128 * 1024 * 1024)

    pos_part, neg_part = pl.pallas_call(
        kernel,
        out_shape=(
            jax.ShapeDtypeStruct((g, t), jnp.float32),
            jax.ShapeDtypeStruct((g, t), jnp.float32),
        ),
        grid_spec=pltpu.PrefetchScalarGridSpec(
            num_scalar_prefetch=3,
            grid=(ncores, P),
            in_specs=[
                pl.BlockSpec((t, Dp), lambda c, p, bi, bj, wt: (bi[c, p], 0)),  # X_i
                pl.BlockSpec((t, Dp), lambda c, p, bi, bj, wt: (bj[c, p], 0)),  # X_j
                pl.BlockSpec((t, 1), lambda c, p, bi, bj, wt: (bi[c, p], 0)),   # labels col
                pl.BlockSpec((1, t), lambda c, p, bi, bj, wt: (0, bj[c, p])),   # labels row
            ],
            out_specs=[
                pl.BlockSpec((1, t), lambda c, p, bi, bj, wt: (bi[c, p], 0)),   # pos
                pl.BlockSpec((1, t), lambda c, p, bi, bj, wt: (bi[c, p], 0)),   # neg
            ],
        ),
        compiler_params=pltpu.CompilerParams(
            dimension_semantics=("parallel", "arbitrary"),
            vmem_limit_bytes=vmem_limit,
        ),
        cost_estimate=cost,
    )(bi, bj, wt, Xp, Xp, lab_col, lab_row)

    # Remove the constant contribution of the zero-padded rows:
    #   pad-pad pairs (same sentinel label) -> pos, relu(pmargin - 0) each;
    #   pad-real pairs (labels differ)      -> neg, relu(margin  + 0) each.
    pos_sum = jnp.sum(pos_part) - float(n_pad * n_pad) * max(float(pmargin), 0.0)
    neg_sum = jnp.sum(neg_part) - float(2 * N * n_pad) * max(float(margin), 0.0)
    pos_sum = jnp.maximum(pos_sum, 0.0)
    neg_sum = jnp.maximum(neg_sum, 0.0)

    # O(N log N) pair counts (no N x N boolean matrix): sum_c n_c^2.
    sl = jnp.sort(labels_i)
    left = jnp.searchsorted(sl, sl, side="left")
    right = jnp.searchsorted(sl, sl, side="right")
    pos_cnt = jnp.sum((right - left).astype(jnp.float32))
    neg_cnt = jnp.float32(N * N) - pos_cnt

    # Matches PyTorch: if a mask is empty, the corresponding loss is 0.0.
    pos_loss = jnp.where(pos_cnt > 0, pos_sum / jnp.maximum(pos_cnt, 1.0), 0.0)
    neg_loss = jnp.where(neg_cnt > 0, neg_sum / jnp.maximum(neg_cnt, 1.0), 0.0)

    return {
        "ctrd_pos": pos_loss * alpha_pos,
        "ctrd_neg": neg_loss * alpha_neg,
    }


def _reference(X, labels, pmargin, margin, alpha_pos, alpha_neg, compute_dtype):
    # Reference uses the same input quantization (bf16 cast) as the kernel,
    # with exact products + f32 accumulation.
    Xq = X.astype(compute_dtype).astype(jnp.float32)
    d = jnp.dot(Xq, Xq.T, precision=lax.Precision.HIGHEST)
    lm = labels[None, :] == labels[:, None]
    pos_cnt = lm.sum()
    neg_cnt = (~lm).sum()
    pos = jnp.where(
        pos_cnt > 0,
        jnp.sum(jnp.where(lm, jnp.maximum(pmargin - d, 0.0), 0.0)) / pos_cnt, 0.0)
    neg = jnp.where(
        neg_cnt > 0,
        jnp.sum(jnp.where(~lm, jnp.maximum(margin + d, 0.0), 0.0)) / neg_cnt, 0.0)
    return pos * alpha_pos, neg * alpha_neg


if __name__ == "__main__":
    # Module hyperparameters (defaults of ClusterLoss.__init__)
    pmargin = 1.0
    margin = 1.0
    alpha_pos = 4.0
    alpha_neg = 1.0
    beta_pos_param = jnp.float32(0.5)  # nn.Parameter(torch.tensor(0.5)) -- unused in forward

    key = jax.random.PRNGKey(0)

    def run_and_check(kx, kl, N, D, n_classes, tile, rtol, atol):
        X = jax.random.normal(kx, (N, D), dtype=jnp.float32)
        labels = jax.random.randint(kl, (N,), 0, n_classes, dtype=jnp.int32)
        losses = cluster_loss(X, labels, pmargin=pmargin, margin=margin,
                              alpha_pos=alpha_pos, alpha_neg=alpha_neg, tile=tile)
        losses = jax.tree_util.tree_map(jax.block_until_ready, losses)
        pos_ref, neg_ref = _reference(X, labels, pmargin, margin,
                                      alpha_pos, alpha_neg, jnp.bfloat16)
        assert jnp.allclose(losses["ctrd_pos"], pos_ref, rtol=rtol, atol=atol), \
            (losses["ctrd_pos"], pos_ref)
        assert jnp.allclose(losses["ctrd_neg"], neg_ref, rtol=rtol, atol=atol), \
            (losses["ctrd_neg"], neg_ref)

    # --- small deterministic test: single tile, single core ---
    kx, kl, key = jax.random.split(key, 3)
    run_and_check(kx, kl, N=8, D=32, n_classes=3, tile=512, rtol=1e-4, atol=1e-4)

    # --- padding/masking correction path (N=300 -> Np=384, single block) ---
    kx, kl, key = jax.random.split(key, 3)
    run_and_check(kx, kl, N=300, D=96, n_classes=7, tile=512, rtol=2e-3, atol=2e-3)

    # --- multi-block symmetric pair grid + 2-core split + row padding ---
    kx, kl, key = jax.random.split(key, 3)
    run_and_check(kx, kl, N=500, D=64, n_classes=10, tile=128, rtol=2e-3, atol=2e-3)

    # --- exercises zero-weight pad entries in the pair schedule (g=2 -> loads 2/1) ---
    kx, kl, key = jax.random.split(key, 3)
    run_and_check(kx, kl, N=256, D=64, n_classes=5, tile=128, rtol=2e-3, atol=2e-3)

    print("KERNEL_OK")
</pallas_src>

<mosaic_0001>
module attributes {stable_mosaic.version = 11 : i64} {
  func.func @kernel(%arg0: i32, %arg1: i32, %arg2: memref<1x1xi32, #tpu.memory_space<smem>>, %arg3: memref<1x1xi32, #tpu.memory_space<smem>>, %arg4: memref<1x1xi32, #tpu.memory_space<smem>>, %arg5: memref<128x128xbf16, #tpu.memory_space<vmem>>, %arg6: memref<128x128xbf16, #tpu.memory_space<vmem>>, %arg7: memref<128x1xi32, #tpu.memory_space<vmem>>, %arg8: memref<1x128xi32, #tpu.memory_space<vmem>>, %arg9: memref<1x128xf32, #tpu.memory_space<vmem>>, %arg10: memref<1x128xf32, #tpu.memory_space<vmem>>) attributes {dimension_semantics = [#tpu.dimension_semantics<parallel>, #tpu.dimension_semantics<arbitrary>], iteration_bounds = array<i64: 1, 1>, scalar_prefetch = 3 : i64, scratch_operands = 0 : i64, tpu.core_type = #tpu.core_type<tc>, window_params = [{transform_indices = @transform_0, window_bounds = array<i64: 128, 128>}, {transform_indices = @transform_1, window_bounds = array<i64: 128, 128>}, {transform_indices = @transform_2, window_bounds = array<i64: 128, 1>}, {transform_indices = @transform_3, window_bounds = array<i64: 1, 128>}, {transform_indices = @transform_4, window_bounds = array<i64: 1, 128>}, {transform_indices = @transform_5, window_bounds = array<i64: 1, 128>}]} {
    %0 = arith.index_cast %arg0 : i32 to index
    %1 = arith.index_cast %arg1 : i32 to index
    %2 = memref.load %arg4[%0, %1] : memref<1x1xi32, #tpu.memory_space<smem>>
    %c1_i32 = arith.constant 1 : i32
    %3 = arith.cmpi eq, %2, %c1_i32 : i32
    %4 = arith.extui %3 : i1 to i32
    %c0_i32 = arith.constant 0 : i32
    %5 = arith.cmpi ne, %4, %c0_i32 : i32
    scf.if %5 {
      %cst_23 = arith.constant 0.000000e+00 : f32
      %41 = vector.broadcast %cst_23 : f32 to vector<1x128xf32>
      %c0_24 = arith.constant 0 : index
      %c0_25 = arith.constant 0 : index
      %42 = vector.load %arg9[%c0_24, %c0_25] : memref<1x128xf32, #tpu.memory_space<vmem>>, vector<1x128xf32>
      tpu.vector_store %arg9[%c0_24, %c0_25], %41 {strides = array<i32>} : memref<1x128xf32, #tpu.memory_space<vmem>>, vector<1x128xf32>,
      %cst_26 = arith.constant 0.000000e+00 : f32
      %43 = vector.broadcast %cst_26 : f32 to vector<1x128xf32>
      %c0_27 = arith.constant 0 : index
      %c0_28 = arith.constant 0 : index
      %44 = vector.load %arg10[%c0_27, %c0_28] : memref<1x128xf32, #tpu.memory_space<vmem>>, vector<1x128xf32>
      tpu.vector_store %arg10[%c0_27, %c0_28], %43 {strides = array<i32>} : memref<1x128xf32, #tpu.memory_space<vmem>>, vector<1x128xf32>,
    } else {
    }
    %c0 = arith.constant 0 : index
    %c0_0 = arith.constant 0 : index
    %6 = vector.load %arg5[%c0, %c0_0] : memref<128x128xbf16, #tpu.memory_space<vmem>>, vector<128x128xbf16>
    %c0_1 = arith.constant 0 : index
    %c0_2 = arith.constant 0 : index
    %7 = vector.load %arg6[%c0_1, %c0_2] : memref<128x128xbf16, #tpu.memory_space<vmem>>, vector<128x128xbf16>
    %cst = arith.constant dense<0.000000e+00> : vector<128x128xf32>
    %8 = tpu.matmul %6, %7, %cst {dimension_numbers = #tpu.dot_dimension_numbers<[1], [1], [0], [0], [0, 0, 1, 0], [], []>} : vector<128x128xbf16>, vector<128x128xbf16>, vector<128x128xf32> -> vector<128x128xf32>
    %c0_3 = arith.constant 0 : index
    %c0_4 = arith.constant 0 : index
    %9 = vector.load %arg7[%c0_3, %c0_4] : memref<128x1xi32, #tpu.memory_space<vmem>>, vector<128x1xi32>
    %c0_5 = arith.constant 0 : index
    %c0_6 = arith.constant 0 : index
    %10 = vector.load %arg8[%c0_5, %c0_6] : memref<1x128xi32, #tpu.memory_space<vmem>>, vector<1x128xi32>
    %11 = vector.broadcast %9 : vector<128x1xi32> to vector<128x128xi32>
    %12 = vector.broadcast %10 : vector<1x128xi32> to vector<128x128xi32>
    %13 = arith.cmpi eq, %11, %12 : vector<128x128xi32>
    %cst_7 = arith.constant 1.000000e+00 : f32
    %14 = vector.broadcast %cst_7 : f32 to vector<128x128xf32>
    %15 = arith.subf %14, %8 : vector<128x128xf32>
    %cst_8 = arith.constant 0.000000e+00 : f32
    %16 = vector.broadcast %cst_8 : f32 to vector<128x128xf32>
    %17 = arith.maximumf %15, %16 : vector<128x128xf32>
    %cst_9 = arith.constant 0.000000e+00 : f32
    %18 = vector.broadcast %cst_9 : f32 to vector<128x128xf32>
    %19 = arith.select %13, %17, %18 : vector<128x128xi1>, vector<128x128xf32>
    %cst_10 = arith.constant 1.000000e+00 : f32
    %20 = vector.broadcast %cst_10 : f32 to vector<128x128xf32>
    %21 = arith.addf %20, %8 : vector<128x128xf32>
    %cst_11 = arith.constant 0.000000e+00 : f32
    %22 = vector.broadcast %cst_11 : f32 to vector<128x128xf32>
    %23 = arith.maximumf %21, %22 : vector<128x128xf32>
    %cst_12 = arith.constant 0.000000e+00 : f32
    %24 = vector.broadcast %cst_12 : f32 to vector<128x128xf32>
    %25 = arith.select %13, %24, %23 : vector<128x128xi1>, vector<128x128xf32>
    %26 = arith.sitofp %2 : i32 to f32
    %c0_13 = arith.constant 0 : index
    %c0_14 = arith.constant 0 : index
    %27 = vector.load %arg9[%c0_13, %c0_14] : memref<1x128xf32, #tpu.memory_space<vmem>>, vector<1x128xf32>
    %cst_15 = arith.constant dense<0.000000e+00> : vector<128xf32>
    %28 = vector.multi_reduction <add>, %19, %cst_15 [0] : vector<128x128xf32> to vector<128xf32>
    %29 = vector.shape_cast %28 : vector<128xf32> to vector<1x128xf32>
    %30 = vector.broadcast %26 : f32 to vector<1x128xf32>
    %31 = arith.mulf %30, %29 : vector<1x128xf32>
    %32 = arith.addf %27, %31 : vector<1x128xf32>
    %c0_16 = arith.constant 0 : index
    %c0_17 = arith.constant 0 : index
    %33 = vector.load %arg9[%c0_16, %c0_17] : memref<1x128xf32, #tpu.memory_space<vmem>>, vector<1x128xf32>
    tpu.vector_store %arg9[%c0_16, %c0_17], %32 {strides = array<i32>} : memref<1x128xf32, #tpu.memory_space<vmem>>, vector<1x128xf32>,
    %c0_18 = arith.constant 0 : index
    %c0_19 = arith.constant 0 : index
    %34 = vector.load %arg10[%c0_18, %c0_19] : memref<1x128xf32, #tpu.memory_space<vmem>>, vector<1x128xf32>
    %cst_20 = arith.constant dense<0.000000e+00> : vector<128xf32>
    %35 = vector.multi_reduction <add>, %25, %cst_20 [0] : vector<128x128xf32> to vector<128xf32>
    %36 = vector.shape_cast %35 : vector<128xf32> to vector<1x128xf32>
    %37 = vector.broadcast %26 : f32 to vector<1x128xf32>
    %38 = arith.mulf %37, %36 : vector<1x128xf32>
    %39 = arith.addf %34, %38 : vector<1x128xf32>
    %c0_21 = arith.constant 0 : index
    %c0_22 = arith.constant 0 : index
    %40 = vector.load %arg10[%c0_21, %c0_22] : memref<1x128xf32, #tpu.memory_space<vmem>>, vector<1x128xf32>
    tpu.vector_store %arg10[%c0_21, %c0_22], %39 {strides = array<i32>} : memref<1x128xf32, #tpu.memory_space<vmem>>, vector<1x128xf32>,
    return
  }
  func.func @transform_0(%arg0: i32, %arg1: i32, %arg2: memref<1x1xi32, #tpu.memory_space<smem>>, %arg3: memref<1x1xi32, #tpu.memory_space<smem>>, %arg4: memref<1x1xi32, #tpu.memory_space<smem>>) -> (i32, i32) {
    %0 = arith.index_cast %arg0 : i32 to index
    %1 = arith.index_cast %arg1 : i32 to index
    %2 = memref.load %arg2[%0, %1] : memref<1x1xi32, #tpu.memory_space<smem>>
    %c0_i32 = arith.constant 0 : i32
    %c0_i32_0 = arith.constant 0 : i32
    return %2, %c0_i32 : i32, i32
  }
  func.func @transform_1(%arg0: i32, %arg1: i32, %arg2: memref<1x1xi32, #tpu.memory_space<smem>>, %arg3: memref<1x1xi32, #tpu.memory_space<smem>>, %arg4: memref<1x1xi32, #tpu.memory_space<smem>>) -> (i32, i32) {
    %0 = arith.index_cast %arg0 : i32 to index
    %1 = arith.index_cast %arg1 : i32 to index
    %2 = memref.load %arg3[%0, %1] : memref<1x1xi32, #tpu.memory_space<smem>>
    %c0_i32 = arith.constant 0 : i32
    %c0_i32_0 = arith.constant 0 : i32
    return %2, %c0_i32 : i32, i32
  }
  func.func @transform_2(%arg0: i32, %arg1: i32, %arg2: memref<1x1xi32, #tpu.memory_space<smem>>, %arg3: memref<1x1xi32, #tpu.memory_space<smem>>, %arg4: memref<1x1xi32, #tpu.memory_space<smem>>) -> (i32, i32) {
    %0 = arith.index_cast %arg0 : i32 to index
    %1 = arith.index_cast %arg1 : i32 to index
    %2 = memref.load %arg2[%0, %1] : memref<1x1xi32, #tpu.memory_space<smem>>
    %c0_i32 = arith.constant 0 : i32
    %c0_i32_0 = arith.constant 0 : i32
    return %2, %c0_i32 : i32, i32
  }
  func.func @transform_3(%arg0: i32, %arg1: i32, %arg2: memref<1x1xi32, #tpu.memory_space<smem>>, %arg3: memref<1x1xi32, #tpu.memory_space<smem>>, %arg4: memref<1x1xi32, #tpu.memory_space<smem>>) -> (i32, i32) {
    %0 = arith.index_cast %arg0 : i32 to index
    %1 = arith.index_cast %arg1 : i32 to index
    %2 = memref.load %arg3[%0, %1] : memref<1x1xi32, #tpu.memory_space<smem>>
    %c0_i32 = arith.constant 0 : i32
    %c0_i32_0 = arith.constant 0 : i32
    return %c0_i32, %2 : i32, i32
  }
  func.func @transform_4(%arg0: i32, %arg1: i32, %arg2: memref<1x1xi32, #tpu.memory_space<smem>>, %arg3: memref<1x1xi32, #tpu.memory_space<smem>>, %arg4: memref<1x1xi32, #tpu.memory_space<smem>>) -> (i32, i32) {
    %0 = arith.index_cast %arg0 : i32 to index
    %1 = arith.index_cast %arg1 : i32 to index
    %2 = memref.load %arg2[%0, %1] : memref<1x1xi32, #tpu.memory_space<smem>>
    %c0_i32 = arith.constant 0 : i32
    %c0_i32_0 = arith.constant 0 : i32
    return %2, %c0_i32 : i32, i32
  }
  func.func @transform_5(%arg0: i32, %arg1: i32, %arg2: memref<1x1xi32, #tpu.memory_space<smem>>, %arg3: memref<1x1xi32, #tpu.memory_space<smem>>, %arg4: memref<1x1xi32, #tpu.memory_space<smem>>) -> (i32, i32) {
    %0 = arith.index_cast %arg0 : i32 to index
    %1 = arith.index_cast %arg1 : i32 to index
    %2 = memref.load %arg2[%0, %1] : memref<1x1xi32, #tpu.memory_space<smem>>
    %c0_i32 = arith.constant 0 : i32
    %c0_i32_0 = arith.constant 0 : i32
    return %2, %c0_i32 : i32, i32
  }
}

</mosaic_0001>

<llo_original>
// kernel: custom-call.2
$region0: #{custom-call.2}
  %s0 = inlined_call_operand.vmem [shape: u32[8], index: 0, kind: output, shape index: {}]

// kernel: cluster_loss.1
$region0: #{cluster_loss.1}
  #allocation0 [shape = 'u32[]', space=smem, size = 0x4, offset = 0x4, fixed_abs, tag = 'smem constant byte address 0x4 - core index']
  #allocation1 [shape = 'u32[144,128]{1,0:T(1,128)}', space=vmem, size = 0x12000, scoped, tag = 'internal scratch']
  #allocation2 [shape = 's32[1]{0}', space=sflag, size = 0x4, scoped, tag = 'scoped memory for cluster_loss.1']
  #allocation3 [shape = 's32[1,1]{1,0:T(1,128)S(6)}', space=smem, size = 0x200, scoped, tag = 'prefetched SMEM operand 0']
  #allocation4 [shape = 's32[1,1]{1,0:T(1,128)S(6)}', space=smem, size = 0x200, scoped, tag = 'prefetched SMEM operand 1']
  #allocation5 [shape = 's32[1,1]{1,0:T(1,128)S(6)}', space=smem, size = 0x200, scoped, tag = 'prefetched SMEM operand 2']
  %s0 = inlined_call_operand.<no memory space> [shape: s32[1,1], index: 0, kind: input, shape index: {}, may-alias: {0,1}]
  %s1 = inlined_call_operand.<no memory space> [shape: s32[1,1], index: 1, kind: input, shape index: {}, may-alias: {0,1}]
  %s2 = inlined_call_operand.<no memory space> [shape: s32[1,1], index: 2, kind: input, shape index: {}]
  %s3 = inlined_call_operand.vmem [shape: bf16[128,128], index: 3, kind: input, shape index: {}, may-alias: {3,4}]
  %s4 = inlined_call_operand.vmem [shape: bf16[128,128], index: 4, kind: input, shape index: {}, may-alias: {3,4}]
  %s5 = inlined_call_operand.vmem [shape: s32[128,1], index: 5, kind: input, shape index: {}]
  %s6 = inlined_call_operand.vmem [shape: s32[1,128], index: 6, kind: input, shape index: {}]
  %s7 = inlined_call_operand.vmem [shape: f32[1,128], index: 7, kind: output, shape index: {0}]
  %s8 = inlined_call_operand.vmem [shape: f32[1,128], index: 8, kind: output, shape index: {1}]
  %9 = xla_tuple %s7, %s8
  %s10 = sld [smem:[#allocation0]]
  $region38: #{cluster_loss.1} parent=0
    _
  %s12 = ssub.s32 1, %s10
  %s13 = scalar_select 0, %s12, %s10
  %14 = sst [smem:[#allocation3]] %s0
  %15 = sst [smem:[#allocation4]] %s1
  %16 = sst [smem:[#allocation5]] %s2
  // Predicated region
  $region2: #{cluster_loss.1} parent=0 // pred_check
    _
  $region3: #{cluster_loss.1} parent=0 // pred_check_branch
    %18 = sbr.rel (0) target = $region5
  $region4: #{cluster_loss.1} parent=0 // pred_region
    %s19 = sadd.s32 0, 0
    %s20 = smul.u32 %s19, 128
    %s21 = sadd.s32 %s20, 0
    %s22 = sld [smem:[#allocation3 + %s21]]
    %s23 = smul.u32 16, %s22
    %p24 = scmp.lt.s32.totalorder %s23, 15
    %s25 = scalar_select %p24, %s23, 15
    %s26 = smul.addr %s25, 4
    %s27 = scalar_lea.vmem %s3, %s26
    %s28 = sadd.s32 0, 0
    %s29 = smul.u32 %s28, 128
    %s30 = sadd.s32 %s29, 0
    %s31 = sld [smem:[#allocation3 + %s30]]
    %s32 = smul.u32 16, %s31
  $region5: #{cluster_loss.1} parent=0 // pred_fallthru
    _
  // Predicated region
  $region6: #{cluster_loss.1} parent=0 // pred_check
    _
  $region7: #{cluster_loss.1} parent=0 // pred_check_branch
    %34 = sbr.rel (0) target = $region9
  $region8: #{cluster_loss.1} parent=0 // pred_region
    %s35 = sadd.s32 0, 0
    %s36 = smul.u32 %s35, 128
    %s37 = sadd.s32 %s36, 0
    %s38 = sld [smem:[#allocation4 + %s37]]
    %s39 = smul.u32 16, %s38
    %p40 = scmp.lt.s32.totalorder %s39, 15
    %s41 = scalar_select %p40, %s39, 15
    %s42 = smul.addr %s41, 4
    %s43 = scalar_lea.vmem %s4, %s42
    %s44 = sadd.s32 0, 0
    %s45 = smul.u32 %s44, 128
    %s46 = sadd.s32 %s45, 0
    %s47 = sld [smem:[#allocation4 + %s46]]
    %s48 = smul.u32 16, %s47
  $region9: #{cluster_loss.1} parent=0 // pred_fallthru
    _
  // Predicated region
  $region10: #{cluster_loss.1} parent=0 // pred_check
    _
  $region11: #{cluster_loss.1} parent=0 // pred_check_branch
    %50 = sbr.rel (0) target = $region13
  $region12: #{cluster_loss.1} parent=0 // pred_region
    %s51 = sadd.s32 0, 0
    %s52 = smul.u32 %s51, 128
    %s53 = sadd.s32 %s52, 0
    %s54 = sld [smem:[#allocation3 + %s53]]
    %s55 = smul.u32 16, %s54
    %p56 = scmp.lt.s32.totalorder %s55, 15
    %s57 = scalar_select %p56, %s55, 15
    %s58 = smul.addr %s57, 8
    %s59 = scalar_lea.vmem %s5, %s58
    %s60 = sadd.s32 0, 0
    %s61 = smul.u32 %s60, 128
    %s62 = sadd.s32 %s61, 0
    %s63 = sld [smem:[#allocation3 + %s62]]
    %s64 = smul.u32 16, %s63
  $region13: #{cluster_loss.1} parent=0 // pred_fallthru
    _
  // Predicated region
  $region14: #{cluster_loss.1} parent=0 // pred_check
    _
  $region15: #{cluster_loss.1} parent=0 // pred_check_branch
    %66 = sbr.rel (0) target = $region17
  $region16: #{cluster_loss.1} parent=0 // pred_region
    %s67 = sadd.s32 0, 0
    %s68 = smul.u32 %s67, 128
    %s69 = sadd.s32 %s68, 0
    %s70 = sld [smem:[#allocation4 + %s69]]
    %p71 = scmp.lt.s32.totalorder %s70, 0
    %s72 = scalar_select %p71, %s70, 0
    %s73 = scalar_lea.vmem %s6, %s72
    %s74 = sadd.s32 0, 0
    %s75 = smul.u32 %s74, 128
    %s76 = sadd.s32 %s75, 0
    %s77 = sld [smem:[#allocation4 + %s76]]
  $region17: #{cluster_loss.1} parent=0 // pred_fallthru
    _
  %s78 = sadd.s32 0, 0
  %s79 = smul.u32 %s78, 128
  %s80 = sadd.s32 %s79, 0
  %s81 = sld [smem:[#allocation3 + %s80]]
  %s82 = smul.u32 16, %s81
  %p83 = scmp.lt.s32.totalorder %s82, 15
  %s84 = scalar_select %p83, %s82, 15
  %s85 = smul.addr %s84, 4
  %s86 = scalar_lea.vmem %s3, %s85
  %s87 = sadd.s32 0, 0
  %s88 = smul.u32 %s87, 128
  %s89 = sadd.s32 %s88, 0
  %s90 = sld [smem:[#allocation4 + %s89]]
  %s91 = smul.u32 16, %s90
  %p92 = scmp.lt.s32.totalorder %s91, 15
  %s93 = scalar_select %p92, %s91, 15
  %s94 = smul.addr %s93, 4
  %s95 = scalar_lea.vmem %s4, %s94
  %s96 = sadd.s32 0, 0
  %s97 = smul.u32 %s96, 128
  %s98 = sadd.s32 %s97, 0
  %s99 = sld [smem:[#allocation3 + %s98]]
  %s100 = smul.u32 16, %s99
  %p101 = scmp.lt.s32.totalorder %s100, 15
  %s102 = scalar_select %p101, %s100, 15
  %s103 = smul.addr %s102, 8
  %s104 = scalar_lea.vmem %s5, %s103
  %s105 = sadd.s32 0, 0
  %s106 = smul.u32 %s105, 128
  %s107 = sadd.s32 %s106, 0
  %s108 = sld [smem:[#allocation4 + %s107]]
  %p109 = scmp.lt.s32.totalorder %s108, 0
  %s110 = scalar_select %p109, %s108, 0
  %s111 = scalar_lea.vmem %s6, %s110
  %s112 = sadd.s32 0, 0
  %s113 = smul.u32 %s112, 128
  %s114 = sadd.s32 %s113, 0
  %s115 = sld [smem:[#allocation3 + %s114]]
  %p116 = scmp.lt.s32.totalorder %s115, 0
  %s117 = scalar_select %p116, %s115, 0
  %s118 = scalar_lea.vmem %s7, %s117
  %s119 = sadd.s32 0, 0
  %s120 = smul.u32 %s119, 128
  %s121 = sadd.s32 %s120, 0
  %s122 = sld [smem:[#allocation3 + %s121]]
  %p123 = scmp.lt.s32.totalorder %s122, 0
  %s124 = scalar_select %p123, %s122, 0
  %s125 = scalar_lea.vmem %s8, %s124
  %s126 = sadd.s32 0, 0
  %s127 = smul.u32 %s126, 128
  %s128 = sadd.s32 %s127, 0
  %s129 = sld [smem:[#allocation3 + %s128]]
  %s130 = smul.u32 16, %s129
  %p131 = scmp.lt.s32.totalorder %s130, 15
  %s132 = scalar_select %p131, %s130, 15
  %s133 = smul.addr %s132, 4
  %s134 = scalar_lea.vmem %s3, %s133
  %s135 = sadd.s32 0, 0
  %s136 = smul.u32 %s135, 128
  %s137 = sadd.s32 %s136, 0
  %s138 = sld [smem:[#allocation3 + %s137]]
  %s139 = smul.u32 16, %s138
  %s140 = sadd.s32 0, 0
  %s141 = smul.u32 %s140, 128
  %s142 = sadd.s32 %s141, 0
  %s143 = sld [smem:[#allocation4 + %s142]]
  %s144 = smul.u32 16, %s143
  %p145 = scmp.lt.s32.totalorder %s144, 15
  %s146 = scalar_select %p145, %s144, 15
  %s147 = smul.addr %s146, 4
  %s148 = scalar_lea.vmem %s4, %s147
  %s149 = sadd.s32 0, 0
  %s150 = smul.u32 %s149, 128
  %s151 = sadd.s32 %s150, 0
  %s152 = sld [smem:[#allocation4 + %s151]]
  %s153 = smul.u32 16, %s152
  %s154 = sadd.s32 0, 0
  %s155 = smul.u32 %s154, 128
  %s156 = sadd.s32 %s155, 0
  %s157 = sld [smem:[#allocation3 + %s156]]
  %s158 = smul.u32 16, %s157
  %p159 = scmp.lt.s32.totalorder %s158, 15
  %s160 = scalar_select %p159, %s158, 15
  %s161 = smul.addr %s160, 8
  %s162 = scalar_lea.vmem %s5, %s161
  %s163 = sadd.s32 0, 0
  %s164 = smul.u32 %s163, 128
  %s165 = sadd.s32 %s164, 0
  %s166 = sld [smem:[#allocation3 + %s165]]
  %s167 = smul.u32 16, %s166
  %s168 = sadd.s32 0, 0
  %s169 = smul.u32 %s168, 128
  %s170 = sadd.s32 %s169, 0
  %s171 = sld [smem:[#allocation4 + %s170]]
  %p172 = scmp.lt.s32.totalorder %s171, 0
  %s173 = scalar_select %p172, %s171, 0
  %s174 = scalar_lea.vmem %s6, %s173
  %s175 = sadd.s32 0, 0
  %s176 = smul.u32 %s175, 128
  %s177 = sadd.s32 %s176, 0
  %s178 = sld [smem:[#allocation4 + %s177]]
  %s179 = sadd.s32 0, 0
  %s180 = smul.u32 %s179, 128
  %s181 = sadd.s32 %s180, 0
  %s182 = sld [smem:[#allocation3 + %s181]]
  %p183 = scmp.lt.s32.totalorder %s182, 0
  %s184 = scalar_select %p183, %s182, 0
  %s185 = scalar_lea.vmem %s7, %s184
  %s186 = sadd.s32 0, 0
  %s187 = smul.u32 %s186, 128
  %s188 = sadd.s32 %s187, 0
  %s189 = sld [smem:[#allocation3 + %s188]]
  %s190 = sadd.s32 0, 0
  %s191 = smul.u32 %s190, 128
  %s192 = sadd.s32 %s191, 0
  %s193 = sld [smem:[#allocation3 + %s192]]
  %p194 = scmp.lt.s32.totalorder %s193, 0
  %s195 = scalar_select %p194, %s193, 0
  %s196 = scalar_lea.vmem %s8, %s195
  %s197 = sadd.s32 0, 0
  %s198 = smul.u32 %s197, 128
  %s199 = sadd.s32 %s198, 0
  %s200 = sld [smem:[#allocation3 + %s199]]
  %s202 = sadd.s32 0, 0
  %s203 = smul.u32 %s202, 128
  %s204 = sadd.s32 %s203, 0
  %s205 = sld [smem:[#allocation5 + %s204]]
  %p206 = scmp.eq.s32.totalorder %s205, 1
  // Predicated region
  $region18: #{cluster_loss.1} parent=0 // pred_check
    %p207 = pneg %p206
  $region19: #{cluster_loss.1} parent=0 // pred_check_branch
    %209 = sbr.rel (%p207) target = $region21
  $region20: #{cluster_loss.1} parent=0 // pred_region
    %210 = vst [vmem:[%s185] sm:$0x1] 0.0
    %211 = vst [vmem:[%s196] sm:$0x1] 0.0
  $region21: #{cluster_loss.1} parent=0 // pred_fallthru
    _
  %v212 = vld [vmem:[%s134] sm:$0xf]
  %v213 = vld [vmem:[%s134 + $0x4] sm:$0xf]
  %v214 = vld [vmem:[%s134 + $0x8] sm:$0xf]
  %v215 = vld [vmem:[%s134 + $0xc] sm:$0xf]
  %v216 = vld [vmem:[%s134 + $0x10] sm:$0xf]
  %v217 = vld [vmem:[%s134 + $0x14] sm:$0xf]
  %v218 = vld [vmem:[%s134 + $0x18] sm:$0xf]
  %v219 = vld [vmem:[%s134 + $0x1c] sm:$0xf]
  %v220 = vld [vmem:[%s134 + $0x20] sm:$0xf]
  %v221 = vld [vmem:[%s134 + $0x24] sm:$0xf]
  %v222 = vld [vmem:[%s134 + $0x28] sm:$0xf]
  %v223 = vld [vmem:[%s134 + $0x2c] sm:$0xf]
  %v224 = vld [vmem:[%s134 + $0x30] sm:$0xf]
  %v225 = vld [vmem:[%s134 + $0x34] sm:$0xf]
  %v226 = vld [vmem:[%s134 + $0x38] sm:$0xf]
  %v227 = vld [vmem:[%s134 + $0x3c] sm:$0xf]
  %v228 = vld [vmem:[%s148] sm:$0xf]
  %v229 = vld [vmem:[%s148 + $0x4] sm:$0xf]
  %v230 = vld [vmem:[%s148 + $0x8] sm:$0xf]
  %v231 = vld [vmem:[%s148 + $0xc] sm:$0xf]
  %v232 = vld [vmem:[%s148 + $0x10] sm:$0xf]
  %v233 = vld [vmem:[%s148 + $0x14] sm:$0xf]
  %v234 = vld [vmem:[%s148 + $0x18] sm:$0xf]
  %v235 = vld [vmem:[%s148 + $0x1c] sm:$0xf]
  %v236 = vld [vmem:[%s148 + $0x20] sm:$0xf]
  %v237 = vld [vmem:[%s148 + $0x24] sm:$0xf]
  %v238 = vld [vmem:[%s148 + $0x28] sm:$0xf]
  %v239 = vld [vmem:[%s148 + $0x2c] sm:$0xf]
  %v240 = vld [vmem:[%s148 + $0x30] sm:$0xf]
  %v241 = vld [vmem:[%s148 + $0x34] sm:$0xf]
  %v242 = vld [vmem:[%s148 + $0x38] sm:$0xf]
  %v243 = vld [vmem:[%s148 + $0x3c] sm:$0xf]
  %v260 = vunpack.c.l.b16 %v212
  %v261 = vunpack.c.l.b16 %v213
  %v262 = vunpack.c.l.b16 %v214
  %v263 = vunpack.c.l.b16 %v215
  %v264 = vunpack.c.l.b16 %v216
  %v265 = vunpack.c.l.b16 %v217
  %v266 = vunpack.c.l.b16 %v218
  %v267 = vunpack.c.l.b16 %v219
  %v268 = vunpack.c.l.b16 %v220
  %v269 = vunpack.c.l.b16 %v221
  %v270 = vunpack.c.l.b16 %v222
  %v271 = vunpack.c.l.b16 %v223
  %v272 = vunpack.c.l.b16 %v224
  %v273 = vunpack.c.l.b16 %v225
  %v274 = vunpack.c.l.b16 %v226
  %v275 = vunpack.c.l.b16 %v227
  %v276 = vpack.c.b16 %v261, %v260
  %v277 = vpack.c.b16 %v263, %v262
  %v278 = vpack.c.b16 %v265, %v264
  %v279 = vpack.c.b16 %v267, %v266
  %v280 = vpack.c.b16 %v269, %v268
  %v281 = vpack.c.b16 %v271, %v270
  %v282 = vpack.c.b16 %v273, %v272
  %v283 = vpack.c.b16 %v275, %v274
  %v308 = vunpack.c.l.b16 %v228
  %v309 = vunpack.c.l.b16 %v229
  %v310 = vunpack.c.l.b16 %v230
  %v311 = vunpack.c.l.b16 %v231
  %v312 = vunpack.c.l.b16 %v232
  %v313 = vunpack.c.l.b16 %v233
  %v314 = vunpack.c.l.b16 %v234
  %v315 = vunpack.c.l.b16 %v235
  %v316 = vunpack.c.l.b16 %v236
  %v317 = vunpack.c.l.b16 %v237
  %v318 = vunpack.c.l.b16 %v238
  %v319 = vunpack.c.l.b16 %v239
  %v320 = vunpack.c.l.b16 %v240
  %v321 = vunpack.c.l.b16 %v241
  %v322 = vunpack.c.l.b16 %v242
  %v323 = vunpack.c.l.b16 %v243
  %v324 = vpack.c.b16 %v309, %v308
  %v325 = vpack.c.b16 %v311, %v310
  %v326 = vpack.c.b16 %v313, %v312
  %v327 = vpack.c.b16 %v315, %v314
  %v328 = vpack.c.b16 %v317, %v316
  %v329 = vpack.c.b16 %v319, %v318
  %v330 = vpack.c.b16 %v321, %v320
  %v331 = vpack.c.b16 %v323, %v322
  %340 = vmatprep.subr.bf16.mxu0 0
  %341 = vmatpush1.bf16.xpose.msra.mxu0 %v331
  %342 = vmatprep.subr.bf16.mxu0 0
  %343 = vmatpush1.bf16.xpose.msra.mxu0 %v330
  %344 = vmatprep.subr.bf16.mxu0 0
  %345 = vmatpush1.bf16.xpose.msra.mxu0 %v329
  %346 = vmatprep.subr.bf16.mxu0 0
  %347 = vmatpush1.bf16.xpose.msra.mxu0 %v328
  %348 = vmatprep.subr.bf16.mxu0 0
  %349 = vmatpush1.bf16.xpose.msra.mxu0 %v327
  %350 = vmatprep.subr.bf16.mxu0 0
  %351 = vmatpush1.bf16.xpose.msra.mxu0 %v326
  %352 = vmatprep.subr.bf16.mxu0 0
  %353 = vmatpush1.bf16.xpose.msra.mxu0 %v325
  %354 = vmatprep.subr.bf16.mxu0 0
  %355 = vmatpush1.bf16.xpose.msra.mxu0 %v324
  %356 = vmatprep.subr.bf16.mxu0 0
  %357 = vmatpush2.bf16.xpose.msra.mxu0 0
  %358 = vmatprep.subr.bf16.mxu0 0
  %359 = vmatpush2.bf16.xpose.msra.mxu0 0
  %360 = vmatprep.subr.bf16.mxu0 0
  %361 = vmatpush2.bf16.xpose.msra.mxu0 0
  %362 = vmatprep.subr.bf16.mxu0 0
  %363 = vmatpush2.bf16.xpose.msra.mxu0 0
  %364 = vmatprep.subr.bf16.mxu0 0
  %365 = vmatpush2.bf16.xpose.msra.mxu0 0
  %366 = vmatprep.subr.bf16.mxu0 0
  %367 = vmatpush2.bf16.xpose.msra.mxu0 0
  %368 = vmatprep.subr.bf16.mxu0 0
  %369 = vmatpush2.bf16.xpose.msra.mxu0 0
  %370 = vmatprep.subr.bf16.mxu0 0
  %371 = vmatpush2.bf16.xpose.msra.mxu0 0
  %372 = vmatprep.mubr.bf16.mxu0 0
  %373 = vmatmul.mubr.bf16.gmra.mxu0 %v276
  %v374 = vpop.f32.mrf.mxu0
  %v375 = vadd.f32 0.0, %v374
  %v376 = vpop.f32.mrf.mxu0
  %v377 = vpop.f32.mrf.mxu0
  %v378 = vadd.f32 0.0, %v377
  %v379 = vpop.f32.mrf.mxu0
  %380 = vmatprep.mubr.bf16.mxu0 0
  %381 = vmatmul.mubr.bf16.gmra.mxu0 %v277
  %v382 = vpop.f32.mrf.mxu0
  %v383 = vadd.f32 0.0, %v382
  %v384 = vpop.f32.mrf.mxu0
  %v385 = vpop.f32.mrf.mxu0
  %v386 = vadd.f32 0.0, %v385
  %v387 = vpop.f32.mrf.mxu0
  %388 = vmatprep.mubr.bf16.mxu0 0
  %389 = vmatmul.mubr.bf16.gmra.mxu0 %v278
  %v390 = vpop.f32.mrf.mxu0
  %v391 = vadd.f32 0.0, %v390
  %v392 = vpop.f32.mrf.mxu0
  %v393 = vpop.f32.mrf.mxu0
  %v394 = vadd.f32 0.0, %v393
  %v395 = vpop.f32.mrf.mxu0
  %396 = vmatprep.mubr.bf16.mxu0 0
  %397 = vmatmul.mubr.bf16.gmra.mxu0 %v279
  %v398 = vpop.f32.mrf.mxu0
  %v399 = vadd.f32 0.0, %v398
  %v400 = vpop.f32.mrf.mxu0
  %v401 = vpop.f32.mrf.mxu0
  %v402 = vadd.f32 0.0, %v401
  %v403 = vpop.f32.mrf.mxu0
  %404 = vmatprep.mubr.bf16.mxu0 0
  %405 = vmatmul.mubr.bf16.gmra.mxu0 %v280
  %v406 = vpop.f32.mrf.mxu0
  %v407 = vadd.f32 0.0, %v406
  %v408 = vpop.f32.mrf.mxu0
  %v409 = vpop.f32.mrf.mxu0
  %v410 = vadd.f32 0.0, %v409
  %v411 = vpop.f32.mrf.mxu0
  %412 = vmatprep.mubr.bf16.mxu0 0
  %413 = vmatmul.mubr.bf16.gmra.mxu0 %v281
  %v414 = vpop.f32.mrf.mxu0
  %v415 = vadd.f32 0.0, %v414
  %v416 = vpop.f32.mrf.mxu0
  %v417 = vpop.f32.mrf.mxu0
  %v418 = vadd.f32 0.0, %v417
  %v419 = vpop.f32.mrf.mxu0
  %420 = vmatprep.mubr.bf16.mxu0 0
  %421 = vmatmul.mubr.bf16.gmra.mxu0 %v282
  %v422 = vpop.f32.mrf.mxu0
  %v423 = vadd.f32 0.0, %v422
  %v424 = vpop.f32.mrf.mxu0
  %v425 = vpop.f32.mrf.mxu0
  %v426 = vadd.f32 0.0, %v425
  %v427 = vpop.f32.mrf.mxu0
  %428 = vmatprep.mubr.bf16.mxu0 0
  %429 = vmatmul.mubr.bf16.gmra.mxu0 %v283
  %v430 = vpop.f32.mrf.mxu0
  %v431 = vadd.f32 0.0, %v430
  %v432 = vpop.f32.mrf.mxu0
  %v433 = vpop.f32.mrf.mxu0
  %v434 = vadd.f32 0.0, %v433
  %v435 = vpop.f32.mrf.mxu0
  %436 = vdwg.mxu0
  %v437 = vld [vmem:[%s162] sm:$0xff]
  %v438 = vld [vmem:[%s162 + $0x8] sm:$0xff]
  %v439 = vld [vmem:[%s162 + $0x10] sm:$0xff]
  %v440 = vld [vmem:[%s162 + $0x18] sm:$0xff]
  %v441 = vld [vmem:[%s162 + $0x20] sm:$0xff]
  %v442 = vld [vmem:[%s162 + $0x28] sm:$0xff]
  %v443 = vld [vmem:[%s162 + $0x30] sm:$0xff]
  %v444 = vld [vmem:[%s162 + $0x38] sm:$0xff]
  %v445 = vld [vmem:[%s162 + $0x40] sm:$0xff]
  %v446 = vld [vmem:[%s162 + $0x48] sm:$0xff]
  %v447 = vld [vmem:[%s162 + $0x50] sm:$0xff]
  %v448 = vld [vmem:[%s162 + $0x58] sm:$0xff]
  %v449 = vld [vmem:[%s162 + $0x60] sm:$0xff]
  %v450 = vld [vmem:[%s162 + $0x68] sm:$0xff]
  %v451 = vld [vmem:[%s162 + $0x70] sm:$0xff]
  %v452 = vld [vmem:[%s162 + $0x78] sm:$0xff]
  %v453 = vld [vmem:[%s174] sm:$0x1]
  %454 = vset.pattern.permute.xlu0 0
  %455 = vperm.xlu0 %454, %v437
  %v456 = vpop.permute.xlu0 %455
  %457 = vset.pattern.permute.xlu0 0
  %458 = vperm.xlu0 %457, %v438
  %v459 = vpop.permute.xlu0 %458
  %460 = vset.pattern.permute.xlu0 0
  %461 = vperm.xlu0 %460, %v439
  %v462 = vpop.permute.xlu0 %461
  %463 = vset.pattern.permute.xlu0 0
  %464 = vperm.xlu0 %463, %v440
  %v465 = vpop.permute.xlu0 %464
  %466 = vset.pattern.permute.xlu0 0
  %467 = vperm.xlu0 %466, %v441
  %v468 = vpop.permute.xlu0 %467
  %469 = vset.pattern.permute.xlu0 0
  %470 = vperm.xlu0 %469, %v442
  %v471 = vpop.permute.xlu0 %470
  %472 = vset.pattern.permute.xlu0 0
  %473 = vperm.xlu0 %472, %v443
  %v474 = vpop.permute.xlu0 %473
  %475 = vset.pattern.permute.xlu0 0
  %476 = vperm.xlu0 %475, %v444
  %v477 = vpop.permute.xlu0 %476
  %478 = vset.pattern.permute.xlu0 0
  %479 = vperm.xlu0 %478, %v445
  %v480 = vpop.permute.xlu0 %479
  %481 = vset.pattern.permute.xlu0 0
  %482 = vperm.xlu0 %481, %v446
  %v483 = vpop.permute.xlu0 %482
  %484 = vset.pattern.permute.xlu0 0
  %485 = vperm.xlu0 %484, %v447
  %v486 = vpop.permute.xlu0 %485
  %487 = vset.pattern.permute.xlu0 0
  %488 = vperm.xlu0 %487, %v448
  %v489 = vpop.permute.xlu0 %488
  %490 = vset.pattern.permute.xlu0 0
  %491 = vperm.xlu0 %490, %v449
  %v492 = vpop.permute.xlu0 %491
  %493 = vset.pattern.permute.xlu0 0
  %494 = vperm.xlu0 %493, %v450
  %v495 = vpop.permute.xlu0 %494
  %496 = vset.pattern.permute.xlu0 0
  %497 = vperm.xlu0 %496, %v451
  %v498 = vpop.permute.xlu0 %497
  %499 = vset.pattern.permute.xlu0 0
  %500 = vperm.xlu0 %499, %v452
  %v501 = vpop.permute.xlu0 %500
  %v502 = vlaneseq
  %v503 = vshrl.u32 %v502, 7
  %v504 = vsub.s32 0, %v503
  %v505 = vrot.slane %v453, %v504
  %vm506 = vcmp.eq.s32.totalorder %v456, %v505
  %vm507 = vcmp.eq.s32.totalorder %v459, %v505
  %vm508 = vcmp.eq.s32.totalorder %v462, %v505
  %vm509 = vcmp.eq.s32.totalorder %v465, %v505
  %vm510 = vcmp.eq.s32.totalorder %v468, %v505
  %vm511 = vcmp.eq.s32.totalorder %v471, %v505
  %vm512 = vcmp.eq.s32.totalorder %v474, %v505
  %vm513 = vcmp.eq.s32.totalorder %v477, %v505
  %vm514 = vcmp.eq.s32.totalorder %v480, %v505
  %vm515 = vcmp.eq.s32.totalorder %v483, %v505
  %vm516 = vcmp.eq.s32.totalorder %v486, %v505
  %vm517 = vcmp.eq.s32.totalorder %v489, %v505
  %vm518 = vcmp.eq.s32.totalorder %v492, %v505
  %vm519 = vcmp.eq.s32.totalorder %v495, %v505
  %vm520 = vcmp.eq.s32.totalorder %v498, %v505
  %vm521 = vcmp.eq.s32.totalorder %v501, %v505
  %v522 = vsub.f32 1.0, %v375
  %v523 = vsub.f32 1.0, %v378
  %v524 = vsub.f32 1.0, %v383
  %v525 = vsub.f32 1.0, %v386
  %v526 = vsub.f32 1.0, %v391
  %v527 = vsub.f32 1.0, %v394
  %v528 = vsub.f32 1.0, %v399
  %v529 = vsub.f32 1.0, %v402
  %v530 = vsub.f32 1.0, %v407
  %v531 = vsub.f32 1.0, %v410
  %v532 = vsub.f32 1.0, %v415
  %v533 = vsub.f32 1.0, %v418
  %v534 = vsub.f32 1.0, %v423
  %v535 = vsub.f32 1.0, %v426
  %v536 = vsub.f32 1.0, %v431
  %v537 = vsub.f32 1.0, %v434
  %v538 = vmax.f32 %v522, 0.0
  %v539 = vmax.f32 %v523, 0.0
  %v540 = vmax.f32 %v524, 0.0
  %v541 = vmax.f32 %v525, 0.0
  %v542 = vmax.f32 %v526, 0.0
  %v543 = vmax.f32 %v527, 0.0
  %v544 = vmax.f32 %v528, 0.0
  %v545 = vmax.f32 %v529, 0.0
  %v546 = vmax.f32 %v530, 0.0
  %v547 = vmax.f32 %v531, 0.0
  %v548 = vmax.f32 %v532, 0.0
  %v549 = vmax.f32 %v533, 0.0
  %v550 = vmax.f32 %v534, 0.0
  %v551 = vmax.f32 %v535, 0.0
  %v552 = vmax.f32 %v536, 0.0
  %v553 = vmax.f32 %v537, 0.0
  %v554 = vsel %vm506, %v538, 0.0
  %v555 = vsel %vm507, %v539, 0.0
  %v556 = vsel %vm508, %v540, 0.0
  %v557 = vsel %vm509, %v541, 0.0
  %v558 = vsel %vm510, %v542, 0.0
  %v559 = vsel %vm511, %v543, 0.0
  %v560 = vsel %vm512, %v544, 0.0
  %v561 = vsel %vm513, %v545, 0.0
  %v562 = vsel %vm514, %v546, 0.0
  %v563 = vsel %vm515, %v547, 0.0
  %v564 = vsel %vm516, %v548, 0.0
  %v565 = vsel %vm517, %v549, 0.0
  %v566 = vsel %vm518, %v550, 0.0
  %v567 = vsel %vm519, %v551, 0.0
  %v568 = vsel %vm520, %v552, 0.0
  %v569 = vsel %vm521, %v553, 0.0
  %v570 = vadd.f32 %v375, 1.0
  %v571 = vadd.f32 %v378, 1.0
  %v572 = vadd.f32 %v383, 1.0
  %v573 = vadd.f32 %v386, 1.0
  %v574 = vadd.f32 %v391, 1.0
  %v575 = vadd.f32 %v394, 1.0
  %v576 = vadd.f32 %v399, 1.0
  %v577 = vadd.f32 %v402, 1.0
  %v578 = vadd.f32 %v407, 1.0
  %v579 = vadd.f32 %v410, 1.0
  %v580 = vadd.f32 %v415, 1.0
  %v581 = vadd.f32 %v418, 1.0
  %v582 = vadd.f32 %v423, 1.0
  %v583 = vadd.f32 %v426, 1.0
  %v584 = vadd.f32 %v431, 1.0
  %v585 = vadd.f32 %v434, 1.0
  %v586 = vmax.f32 %v570, 0.0
  %v587 = vmax.f32 %v571, 0.0
  %v588 = vmax.f32 %v572, 0.0
  %v589 = vmax.f32 %v573, 0.0
  %v590 = vmax.f32 %v574, 0.0
  %v591 = vmax.f32 %v575, 0.0
  %v592 = vmax.f32 %v576, 0.0
  %v593 = vmax.f32 %v577, 0.0
  %v594 = vmax.f32 %v578, 0.0
  %v595 = vmax.f32 %v579, 0.0
  %v596 = vmax.f32 %v580, 0.0
  %v597 = vmax.f32 %v581, 0.0
  %v598 = vmax.f32 %v582, 0.0
  %v599 = vmax.f32 %v583, 0.0
  %v600 = vmax.f32 %v584, 0.0
  %v601 = vmax.f32 %v585, 0.0
  %v602 = vsel %vm506, 0.0, %v586
  %v603 = vsel %vm507, 0.0, %v587
  %v604 = vsel %vm508, 0.0, %v588
  %v605 = vsel %vm509, 0.0, %v589
  %v606 = vsel %vm510, 0.0, %v590
  %v607 = vsel %vm511, 0.0, %v591
  %v608 = vsel %vm512, 0.0, %v592
  %v609 = vsel %vm513, 0.0, %v593
  %v610 = vsel %vm514, 0.0, %v594
  %v611 = vsel %vm515, 0.0, %v595
  %v612 = vsel %vm516, 0.0, %v596
  %v613 = vsel %vm517, 0.0, %v597
  %v614 = vsel %vm518, 0.0, %v598
  %v615 = vsel %vm519, 0.0, %v599
  %v616 = vsel %vm520, 0.0, %v600
  %v617 = vsel %vm521, 0.0, %v601
  %s618 = scvt.s32.f32 %s205
  %v619 = vld [vmem:[%s185] sm:$0x1]
  %v620 = vadd.f32 %v554, %v555
  %v621 = vadd.f32 %v620, %v556
  %v622 = vadd.f32 %v621, %v557
  %v623 = vadd.f32 %v622, %v558
  %v624 = vadd.f32 %v623, %v559
  %v625 = vadd.f32 %v624, %v560
  %v626 = vadd.f32 %v625, %v561
  %v627 = vadd.f32 %v626, %v562
  %v628 = vadd.f32 %v627, %v563
  %v629 = vadd.f32 %v628, %v564
  %v630 = vadd.f32 %v629, %v565
  %v631 = vadd.f32 %v630, %v566
  %v632 = vadd.f32 %v631, %v567
  %v633 = vadd.f32 %v632, %v568
  %v634 = vadd.f32 %v633, %v569
  %v635 = vrot.slane %v634, 4
  %v636 = vadd.f32 %v634, %v635
  %v637 = vrot.slane %v636, 2
  %v638 = vadd.f32 %v636, %v637
  %v639 = vrot.slane %v638, 1
  %v640 = vadd.f32 %v638, %v639
  %v641 = vstv %s618
  %v642 = vmul.f32 %v641, %v640
  %v643 = vadd.f32 %v619, %v642
  %644 = vst [vmem:[%s185] sm:$0x1] %v643
  %v645 = vld [vmem:[%s196] sm:$0x1]
  %v646 = vadd.f32 %v602, %v603
  %v647 = vadd.f32 %v646, %v604
  %v648 = vadd.f32 %v647, %v605
  %v649 = vadd.f32 %v648, %v606
  %v650 = vadd.f32 %v649, %v607
  %v651 = vadd.f32 %v650, %v608
  %v652 = vadd.f32 %v651, %v609
  %v653 = vadd.f32 %v652, %v610
  %v654 = vadd.f32 %v653, %v611
  %v655 = vadd.f32 %v654, %v612
  %v656 = vadd.f32 %v655, %v613
  %v657 = vadd.f32 %v656, %v614
  %v658 = vadd.f32 %v657, %v615
  %v659 = vadd.f32 %v658, %v616
  %v660 = vadd.f32 %v659, %v617
  %v661 = vrot.slane %v660, 4
  %v662 = vadd.f32 %v660, %v661
  %v663 = vrot.slane %v662, 2
  %v664 = vadd.f32 %v662, %v663
  %v665 = vrot.slane %v664, 1
  %v666 = vadd.f32 %v664, %v665
  %v667 = vmul.f32 %v641, %v666
  %v668 = vadd.f32 %v645, %v667
  %669 = vst [vmem:[%s196] sm:$0x1] %v668
  %s670 = sadd.s32 0, 0
  %s671 = smul.u32 %s670, 128
  %s672 = sadd.s32 %s671, 0
  %s673 = sld [smem:[#allocation3 + %s672]]
  %p674 = scmp.lt.s32.totalorder %s673, 0
  %s675 = scalar_select %p674, %s673, 0
  %s676 = scalar_lea.vmem %s7, %s675
  %s677 = sadd.s32 0, 0
  %s678 = smul.u32 %s677, 128
  %s679 = sadd.s32 %s678, 0
  %s680 = sld [smem:[#allocation3 + %s679]]
  %p681 = scmp.lt.s32.totalorder %s680, 0
  %s682 = scalar_select %p681, %s680, 0
  %s683 = scalar_lea.vmem %s8, %s682
  // Predicated region
  $region22: #{cluster_loss.1} parent=0 // pred_check
    _
  $region23: #{cluster_loss.1} parent=0 // pred_check_branch
    %685 = sbr.rel (0) target = $region25
  $region24: #{cluster_loss.1} parent=0 // pred_region
    %s686 = sadd.s32 0, 0
    %s687 = smul.u32 %s686, 128
    %s688 = sadd.s32 %s687, 0
    %s689 = sld [smem:[#allocation3 + %s688]]
  $region25: #{cluster_loss.1} parent=0 // pred_fallthru
    _
  // Predicated region
  $region26: #{cluster_loss.1} parent=0 // pred_check
    _
  $region27: #{cluster_loss.1} parent=0 // pred_check_branch
    %691 = sbr.rel (0) target = $region29
  $region28: #{cluster_loss.1} parent=0 // pred_region
    %s692 = sadd.s32 0, 0
    %s693 = smul.u32 %s692, 128
    %s694 = sadd.s32 %s693, 0
    %s695 = sld [smem:[#allocation3 + %s694]]
  $region29: #{cluster_loss.1} parent=0 // pred_fallthru
    _
  // Predicated region
  $region30: #{cluster_loss.1} parent=0 // pred_check
    _
  $region31: #{cluster_loss.1} parent=0 // pred_check_branch
    %697 = sbr.rel (0) target = $region33
  $region32: #{cluster_loss.1} parent=0 // pred_region
    %s698 = sadd.s32 0, 0
    %s699 = smul.u32 %s698, 128
    %s700 = sadd.s32 %s699, 0
    %s701 = sld [smem:[#allocation3 + %s700]]
    %p702 = scmp.lt.s32.totalorder %s701, 0
    %s703 = scalar_select %p702, %s701, 0
    %s704 = scalar_lea.vmem %s7, %s703
  $region33: #{cluster_loss.1} parent=0 // pred_fallthru
    _
  // Predicated region
  $region34: #{cluster_loss.1} parent=0 // pred_check
    _
  $region35: #{cluster_loss.1} parent=0 // pred_check_branch
    %706 = sbr.rel (0) target = $region37
  $region36: #{cluster_loss.1} parent=0 // pred_region
    %s707 = sadd.s32 0, 0
    %s708 = smul.u32 %s707, 128
    %s709 = sadd.s32 %s708, 0
    %s710 = sld [smem:[#allocation3 + %s709]]
    %p711 = scmp.lt.s32.totalorder %s710, 0
    %s712 = scalar_select %p711, %s710, 0
    %s713 = scalar_lea.vmem %s8, %s712
  $region37: #{cluster_loss.1} parent=0 // pred_fallthru
    _

</llo_original>
